<compile_context>
chip_gen: v7x
topology: tpu7x:2x2x1
jax: 0.10.0
libtpu: 0.0.40
codegen_flags: <defaults>
</compile_context>

<pallas_src>
import numpy as np
import jax
import jax.numpy as jnp
from jax.experimental import pallas as pl
from jax.experimental.pallas import tpu as pltpu


# ----------------------------- Pallas kernel -----------------------------
def lora_adapter_kernel(x_ref, wa_t_ref, wb_t_ref, out_ref):
    # x_ref:    (tm, d_model)      activation row tile (bf16)
    # wa_t_ref: (d_model, r)       lora_a weight, pre-transposed (bf16)
    # wb_t_ref: (r, out_feat_p)    lora_b weight, pre-transposed, scale folded in (bf16)
    down = jnp.dot(x_ref[...], wa_t_ref[...],
                   preferred_element_type=jnp.float32)           # (tm, r) f32 acc
    up = jnp.dot(down.astype(wb_t_ref.dtype), wb_t_ref[...],
                 preferred_element_type=jnp.float32)             # (tm, out_feat_p)
    out_ref[...] = up.astype(out_ref.dtype)


# ----------------------------- helpers -----------------------------
def _vmem_capacity_bytes():
    """Per-core VMEM capacity; conservative fallback = v7x 64 MiB/TC."""
    try:
        info = pltpu.get_tpu_info()
        for name in ("vmem_capacity_bytes", "vmem_size_bytes", "vmem_bytes"):
            v = getattr(info, name, None)
            if isinstance(v, int) and v > 0:
                return v
    except Exception:
        pass
    return 64 << 20


def _round_up(x, m):
    return -(-x // m) * m


# ----------------------------- wrapper -----------------------------
def lora_adapter_forward(x, wa, wb, scale, *, block_rows=1024,
                         compute_dtype=jnp.bfloat16, out_dtype=None):
    """LoRA adapter forward.

    x:     (..., d_model) activations (bf16 preferred)
    wa:    (r, d_model)   lora_a.weight (PyTorch (out, in) layout)
    wb:    (out_feat, r)  lora_b.weight (PyTorch (out, in) layout)
    scale: scalar / (1,)  lora_scale
    returns (..., out_feat) in `out_dtype` (default: x.dtype)
    """
    orig_shape = x.shape
    d_model = orig_shape[-1]
    M = int(np.prod(orig_shape[:-1]))
    r = wa.shape[0]
    out_feat = wb.shape[0]
    out_dtype = x.dtype if out_dtype is None else out_dtype

    # Flatten all leading dims into one row axis; keep native (bf16) dtype.
    x2 = x.reshape(M, d_model).astype(compute_dtype)

    # Host-side one-time weight prep: transpose so the kernel contracts on the
    # last dim, fold lora_scale into the up-projection (in f32), cast to bf16.
    scale_f32 = jnp.asarray(scale, jnp.float32).reshape(())
    wa_t = jnp.asarray(wa, jnp.float32).T.astype(compute_dtype)                 # (d_model, r)
    wb_t = (jnp.asarray(wb, jnp.float32).T * scale_f32).astype(compute_dtype)   # (r, out_feat)

    # Lane-dense output: pad feature dim to a multiple of 128 if needed.
    out_feat_p = out_feat if out_feat % 128 == 0 else _round_up(out_feat, 128)
    if out_feat_p != out_feat:
        wb_t = jnp.pad(wb_t, ((0, 0), (0, out_feat_p - out_feat)))

    # ---- per-chip row-tile sizing (VMEM budget aware; v7x has 64 MiB/TC) ----
    in_bytes = jnp.dtype(compute_dtype).itemsize
    ob_bytes = jnp.dtype(out_dtype).itemsize
    vmem_budget = int(_vmem_capacity_bytes() * 3 // 4)
    weight_bytes = 2 * (d_model * r + r * out_feat_p) * in_bytes     # double-buffered
    per_row_bytes = 2 * (d_model * in_bytes + out_feat_p * ob_bytes)  # dbl-buffered x + out
    headroom = 4 << 20
    tm_fit = max(8, (vmem_budget - weight_bytes - headroom) // max(per_row_bytes, 1))
    tm = min(block_rows, tm_fit, _round_up(M, 8))
    tm = max(8, (tm // 8) * 8)

    grid = (pl.cdiv(M, tm),)   # ragged last tile handled by Pallas masking

    cost = pl.CostEstimate(
        flops=2 * M * r * (d_model + out_feat_p),
        transcendentals=0,
        bytes_accessed=(M * d_model * in_bytes + M * out_feat_p * ob_bytes
                        + (d_model * r + r * out_feat_p) * in_bytes),
    )

    out = pl.pallas_call(
        lora_adapter_kernel,
        out_shape=jax.ShapeDtypeStruct((M, out_feat_p), out_dtype),
        grid=grid,
        in_specs=[
            pl.BlockSpec((tm, d_model), lambda i: (i, 0)),        # activations: row-tiled
            pl.BlockSpec(wa_t.shape, lambda i: (0, 0)),           # weights: VMEM-resident
            pl.BlockSpec(wb_t.shape, lambda i: (0, 0)),
        ],
        out_specs=pl.BlockSpec((tm, out_feat_p), lambda i: (i, 0)),
        compiler_params=pltpu.CompilerParams(
            dimension_semantics=("parallel",),
            vmem_limit_bytes=vmem_budget,
        ),
        cost_estimate=cost,
    )(x2, wa_t, wb_t)

    if out_feat_p != out_feat:
        out = out[:, :out_feat]
    return out.reshape(orig_shape[:-1] + (out_feat,))


# ------------------------- pure-JAX reference (check) -------------------------
def lora_adapter_reference(x, wa, wb, scale):
    xf = jnp.asarray(x, jnp.float32)
    down = jnp.einsum("...d,rd->...r", xf, jnp.asarray(wa, jnp.float32))
    up = jnp.einsum("...r,or->...o", down, jnp.asarray(wb, jnp.float32))
    return up * jnp.asarray(scale, jnp.float32).reshape(())


# ------------------------------------ main ------------------------------------
if __name__ == "__main__":
    B, S = 2, 16
    d_model, r, out_feat = 32, 16, 32

    key = jax.random.PRNGKey(0)
    k1, k2, k3 = jax.random.split(key, 3)

    # Activations in bf16 (native transformer activation dtype).
    x = jax.random.normal(k1, (B, S, d_model), jnp.float32).astype(jnp.bfloat16)
    wa = 0.1 * jax.random.normal(k2, (r, d_model), jnp.float32)
    # NOTE: the PyTorch module zero-inits lora_b; random values here make the
    # numeric check meaningful (parameter values, not forward semantics).
    wb = 0.1 * jax.random.normal(k3, (out_feat, r), jnp.float32)
    scale = jnp.full((1,), 0.75, jnp.float32)   # lora_scale parameter

    out = jax.block_until_ready(lora_adapter_forward(x, wa, wb, scale))
    ref = jax.block_until_ready(lora_adapter_reference(x, wa, wb, scale))

    assert out.shape == (B, S, out_feat), out.shape
    assert out.dtype == jnp.bfloat16, out.dtype
    out_f32 = np.asarray(out, dtype=np.float32)
    assert np.all(np.isfinite(out_f32))
    # bf16 inputs / bf16 intermediate re-cast -> loose tolerance vs f32 reference.
    np.testing.assert_allclose(out_f32, np.asarray(ref), rtol=2e-2, atol=2e-2)

    print("KERNEL_OK")
</pallas_src>

<mosaic_0001>
module attributes {stable_mosaic.version = 11 : i64} {
  func.func @lora_adapter_kernel(%arg0: i32, %arg1: memref<32x32xbf16, #tpu.memory_space<vmem>>, %arg2: memref<32x16xbf16, #tpu.memory_space<vmem>>, %arg3: memref<16x128xbf16, #tpu.memory_space<vmem>>, %arg4: memref<32x128xbf16, #tpu.memory_space<vmem>>) attributes {dimension_semantics = [#tpu.dimension_semantics<parallel>], iteration_bounds = array<i64: 1>, scalar_prefetch = 0 : i64, scratch_operands = 0 : i64, tpu.core_type = #tpu.core_type<tc>, window_params = [{transform_indices = @transform_0, window_bounds = array<i64: 32, 32>}, {pipeline_mode = #tpu.pipeline_mode<synchronous>, transform_indices = @transform_1, window_bounds = array<i64: 32, 16>}, {pipeline_mode = #tpu.pipeline_mode<synchronous>, transform_indices = @transform_2, window_bounds = array<i64: 16, 128>}, {transform_indices = @transform_3, window_bounds = array<i64: 32, 128>}]} {
    %c0 = arith.constant 0 : index
    %c0_0 = arith.constant 0 : index
    %0 = vector.load %arg1[%c0, %c0_0] : memref<32x32xbf16, #tpu.memory_space<vmem>>, vector<32x32xbf16>
    %c0_1 = arith.constant 0 : index
    %c0_2 = arith.constant 0 : index
    %1 = vector.load %arg2[%c0_1, %c0_2] : memref<32x16xbf16, #tpu.memory_space<vmem>>, vector<32x16xbf16>
    %cst = arith.constant dense<0.000000e+00> : vector<32x16xf32>
    %2 = tpu.matmul %0, %1, %cst {dimension_numbers = #tpu.dot_dimension_numbers<[1], [0], [0], [1], [0, 0, 1, 1], [], []>} : vector<32x32xbf16>, vector<32x16xbf16>, vector<32x16xf32> -> vector<32x16xf32>
    %3 = arith.truncf %2 : vector<32x16xf32> to vector<32x16xbf16>
    %c0_3 = arith.constant 0 : index
    %c0_4 = arith.constant 0 : index
    %4 = vector.load %arg3[%c0_3, %c0_4] : memref<16x128xbf16, #tpu.memory_space<vmem>>, vector<16x128xbf16>
    %cst_5 = arith.constant dense<0.000000e+00> : vector<32x128xf32>
    %5 = tpu.matmul %3, %4, %cst_5 {dimension_numbers = #tpu.dot_dimension_numbers<[1], [0], [0], [1], [0, 0, 1, 1], [], []>} : vector<32x16xbf16>, vector<16x128xbf16>, vector<32x128xf32> -> vector<32x128xf32>
    %6 = arith.truncf %5 : vector<32x128xf32> to vector<32x128xbf16>
    %c0_6 = arith.constant 0 : index
    %c0_7 = arith.constant 0 : index
    %7 = vector.load %arg4[%c0_6, %c0_7] : memref<32x128xbf16, #tpu.memory_space<vmem>>, vector<32x128xbf16>
    tpu.vector_store %arg4[%c0_6, %c0_7], %6 {strides = array<i32>} : memref<32x128xbf16, #tpu.memory_space<vmem>>, vector<32x128xbf16>,
    return
  }
  func.func @transform_0(%arg0: i32) -> (i32, i32) {
    %c0_i32 = arith.constant 0 : i32
    %c0_i32_0 = arith.constant 0 : i32
    return %arg0, %c0_i32 : i32, i32
  }
  func.func @transform_1(%arg0: i32) -> (i32, i32) {
    %c0_i32 = arith.constant 0 : i32
    %c0_i32_0 = arith.constant 0 : i32
    %c0_i32_1 = arith.constant 0 : i32
    return %c0_i32, %c0_i32_0 : i32, i32
  }
  func.func @transform_2(%arg0: i32) -> (i32, i32) {
    %c0_i32 = arith.constant 0 : i32
    %c0_i32_0 = arith.constant 0 : i32
    %c0_i32_1 = arith.constant 0 : i32
    return %c0_i32, %c0_i32_0 : i32, i32
  }
  func.func @transform_3(%arg0: i32) -> (i32, i32) {
    %c0_i32 = arith.constant 0 : i32
    %c0_i32_0 = arith.constant 0 : i32
    return %arg0, %c0_i32 : i32, i32
  }
}

</mosaic_0001>

<llo_original>
// kernel: tpu_custom_call.1
$region0: #{tpu_custom_call.1}
  #allocation0 [shape = 'u32[]', space=smem, size = 0x4, offset = 0x4, fixed_abs, tag = 'smem constant byte address 0x4 - core index']
  #allocation1 [shape = 'u32[144,128]{1,0:T(1,128)}', space=vmem, size = 0x12000, scoped, tag = 'internal scratch']
  %s0 = inlined_call_operand.vmem [shape: bf16[32,32], index: 0, kind: input, shape index: {}]
  %s1 = inlined_call_operand.vmem [shape: bf16[32,16], index: 1, kind: input, shape index: {}]
  %s2 = inlined_call_operand.vmem [shape: bf16[16,128], index: 2, kind: input, shape index: {}]
  %s3 = inlined_call_operand.hbm [shape: bf16[32,128], index: 3, kind: output, shape index: {}]
  %s4 = sld [smem:[#allocation0]]
  $region22: #{tpu_custom_call.1} parent=0
    _
  %s6 = ssub.s32 1, %s4
  %s7 = scalar_select 0, %s6, %s4
  $region1: #{tpu_custom_call.1} parent=0
    #allocation2 [shape = 'u8[8192]{0}', space=vmem, size = 0x2000, scoped, tag = 'output window, operand 0, single buffered']
    #allocation3 [shape = 's32[1]{0}', space=sflag, size = 0x4, scoped, tag = 'scoped memory for tpu_custom_call.1']
    %8 = vsyncpa [#allocation3], 0
    // Predicated region
    $region2: #{tpu_custom_call.1} parent=1 // pred_check
      _
    $region3: #{tpu_custom_call.1} parent=1 // pred_check_branch
      %10 = sbr.rel (0) target = $region5
    $region4: #{tpu_custom_call.1} parent=1 // pred_region
      _
    $region5: #{tpu_custom_call.1} parent=1 // pred_fallthru
      _
    // Predicated region
    $region6: #{tpu_custom_call.1} parent=1 // pred_check
      _
    $region7: #{tpu_custom_call.1} parent=1 // pred_check_branch
      %12 = sbr.rel (0) target = $region9
    $region8: #{tpu_custom_call.1} parent=1 // pred_region
      _
    $region9: #{tpu_custom_call.1} parent=1 // pred_fallthru
      _
    // Predicated region
    $region10: #{tpu_custom_call.1} parent=1 // pred_check
      _
    $region11: #{tpu_custom_call.1} parent=1 // pred_check_branch
      %14 = sbr.rel (0) target = $region13
    $region12: #{tpu_custom_call.1} parent=1 // pred_region
      _
    $region13: #{tpu_custom_call.1} parent=1 // pred_fallthru
      _
    %v16 = vld [vmem:[%s0] sm:$0xf]
    %v17 = vld [vmem:[%s0 + $0x4] sm:$0xf]
    %v18 = vld [vmem:[%s0 + $0x8] sm:$0xf]
    %v19 = vld [vmem:[%s0 + $0xc] sm:$0xf]
    %v20 = vld [vmem:[%s1] sm:$0xf]
    %v21 = vld [vmem:[%s1 + $0x4] sm:$0xf]
    %v22 = vld [vmem:[%s1 + $0x8] sm:$0xf]
    %v23 = vld [vmem:[%s1 + $0xc] sm:$0xf]
    %v28 = vunpack.c.l.b16 %v16
    %v29 = vunpack.c.l.b16 %v17
    %v30 = vunpack.c.l.b16 %v18
    %v31 = vunpack.c.l.b16 %v19
    %v32 = vpack.c.b16 %v29, %v28
    %v33 = vpack.c.b16 %v31, %v30
    %v38 = vunpack.c.l.b16 %v20
    %v39 = vunpack.c.l.b16 %v21
    %v40 = vunpack.c.l.b16 %v22
    %v41 = vunpack.c.l.b16 %v23
    %v42 = vpack.c.b16 %v39, %v38
    %v43 = vpack.c.b16 %v41, %v40
    %vm46 = vcmask 261120
    %v48 = vsel %vm46, %v32, 0
    %v51 = vsel %vm46, %v33, 0
    %53 = vmatprep.subr.bf16.mxu0 0
    %54 = vmatpush1.bf16.msra.mxu0 %v42
    %55 = vmatprep.subr.bf16.mxu0 0
    %56 = vmatpush1.bf16.msra.mxu0 %v43
    %57 = vmatprep.subr.bf16.mxu0 0
    %58 = vmatpush1.bf16.msra.mxu0 0
    %59 = vmatprep.subr.bf16.mxu0 0
    %60 = vmatpush1.bf16.msra.mxu0 0
    %61 = vmatprep.subr.bf16.mxu0 0
    %62 = vmatpush1.bf16.msra.mxu0 0
    %63 = vmatprep.subr.bf16.mxu0 0
    %64 = vmatpush1.bf16.msra.mxu0 0
    %65 = vmatprep.subr.bf16.mxu0 0
    %66 = vmatpush1.bf16.msra.mxu0 0
    %67 = vmatprep.subr.bf16.mxu0 0
    %68 = vmatpush1.bf16.msra.mxu0 0
    %69 = vmatprep.subr.bf16.mxu0 0
    %70 = vmatpush1.bf16.msra.mxu0 0
    %71 = vmatprep.subr.bf16.mxu0 0
    %72 = vmatpush1.bf16.msra.mxu0 0
    %73 = vmatprep.subr.bf16.mxu0 0
    %74 = vmatpush1.bf16.msra.mxu0 0
    %75 = vmatprep.subr.bf16.mxu0 0
    %76 = vmatpush1.bf16.msra.mxu0 0
    %77 = vmatprep.subr.bf16.mxu0 0
    %78 = vmatpush1.bf16.msra.mxu0 0
    %79 = vmatprep.subr.bf16.mxu0 0
    %80 = vmatpush1.bf16.msra.mxu0 0
    %81 = vmatprep.subr.bf16.mxu0 0
    %82 = vmatpush1.bf16.msra.mxu0 0
    %83 = vmatprep.subr.bf16.mxu0 0
    %84 = vmatpush1.bf16.msra.mxu0 0
    %85 = vmatprep.mubr.bf16.mxu0 0
    %86 = vmatmul.mubr.bf16.gmra.mrb[0].mxu0 %v48
    %v87 = vpop.f32.mrb[0].mxu0
    %v88 = vadd.f32 0.0, %v87
    %v89 = vpop.f32.mrb[0].mxu0
    %v90 = vpop.f32.mrb[0].mxu0
    %v91 = vadd.f32 0.0, %v90
    %v92 = vpop.f32.mrb[0].mxu0
    %93 = vmatprep.mubr.bf16.mxu0 0
    %94 = vmatmul.mubr.bf16.gmra.mrb[0].mxu0 %v51
    %v95 = vpop.f32.mrb[0].mxu0
    %v96 = vadd.f32 0.0, %v95
    %v97 = vpop.f32.mrb[0].mxu0
    %v98 = vpop.f32.mrb[0].mxu0
    %v99 = vadd.f32 0.0, %v98
    %v100 = vpop.f32.mrb[0].mxu0
    %101 = vdwg.mxu0
    %v102 = vpack.c.bf16 %v91, %v88
    %v103 = vpack.c.bf16 %v99, %v96
    %v104 = vld [vmem:[%s2] sm:$0xf]
    %v105 = vld [vmem:[%s2 + $0x4] sm:$0xf]
    %v108 = vunpack.c.l.b16 %v104
    %v109 = vunpack.c.l.b16 %v105
    %v110 = vpack.c.b16 %v109, %v108
    %vm112 = vcmask 130048
    %v114 = vsel %vm112, %v102, 0
    %v117 = vsel %vm112, %v103, 0
    %119 = vmatprep.subr.bf16.mxu0 0
    %120 = vmatpush1.bf16.msra.mxu0 %v110
    %121 = vmatprep.subr.bf16.mxu0 0
    %122 = vmatpush1.bf16.msra.mxu0 0
    %123 = vmatprep.subr.bf16.mxu0 0
    %124 = vmatpush1.bf16.msra.mxu0 0
    %125 = vmatprep.subr.bf16.mxu0 0
    %126 = vmatpush1.bf16.msra.mxu0 0
    %127 = vmatprep.subr.bf16.mxu0 0
    %128 = vmatpush1.bf16.msra.mxu0 0
    %129 = vmatprep.subr.bf16.mxu0 0
    %130 = vmatpush1.bf16.msra.mxu0 0
    %131 = vmatprep.subr.bf16.mxu0 0
    %132 = vmatpush1.bf16.msra.mxu0 0
    %133 = vmatprep.subr.bf16.mxu0 0
    %134 = vmatpush1.bf16.msra.mxu0 0
    %135 = vmatprep.subr.bf16.mxu0 0
    %136 = vmatpush1.bf16.msra.mxu0 0
    %137 = vmatprep.subr.bf16.mxu0 0
    %138 = vmatpush1.bf16.msra.mxu0 0
    %139 = vmatprep.subr.bf16.mxu0 0
    %140 = vmatpush1.bf16.msra.mxu0 0
    %141 = vmatprep.subr.bf16.mxu0 0
    %142 = vmatpush1.bf16.msra.mxu0 0
    %143 = vmatprep.subr.bf16.mxu0 0
    %144 = vmatpush1.bf16.msra.mxu0 0
    %145 = vmatprep.subr.bf16.mxu0 0
    %146 = vmatpush1.bf16.msra.mxu0 0
    %147 = vmatprep.subr.bf16.mxu0 0
    %148 = vmatpush1.bf16.msra.mxu0 0
    %149 = vmatprep.subr.bf16.mxu0 0
    %150 = vmatpush1.bf16.msra.mxu0 0
    %151 = vmatprep.mubr.bf16.mxu0 0
    %152 = vmatmul.mubr.bf16.gmra.mrb[0].mxu0 %v114
    %v153 = vpop.f32.mrb[0].mxu0
    %v154 = vadd.f32 0.0, %v153
    %v155 = vpop.f32.mrb[0].mxu0
    %v156 = vpop.f32.mrb[0].mxu0
    %v157 = vadd.f32 0.0, %v156
    %v158 = vpop.f32.mrb[0].mxu0
    %159 = vmatprep.mubr.bf16.mxu0 0
    %160 = vmatmul.mubr.bf16.gmra.mrb[0].mxu0 %v117
    %v161 = vpop.f32.mrb[0].mxu0
    %v162 = vadd.f32 0.0, %v161
    %v163 = vpop.f32.mrb[0].mxu0
    %v164 = vpop.f32.mrb[0].mxu0
    %v165 = vadd.f32 0.0, %v164
    %v166 = vpop.f32.mrb[0].mxu0
    %167 = vdwg.mxu0
    %v168 = vpack.c.bf16 %v157, %v154
    %v169 = vpack.c.bf16 %v165, %v162
    %v172 = vunpack.c.l.b16 %v168
    %v173 = vunpack.c.h.b16 %v168
    %v174 = vunpack.c.l.b16 %v169
    %v175 = vunpack.c.h.b16 %v169
    %v176 = vpack.c.b16 %v172, %v172
    %v177 = vpack.c.b16 %v173, %v173
    %v178 = vpack.c.b16 %v174, %v174
    %v179 = vpack.c.b16 %v175, %v175
    %184 = vst [vmem:[#allocation2] sm:$0xf] %v176
    %185 = vst [vmem:[#allocation2 + $0x4] sm:$0xf] %v177
    %186 = vst [vmem:[#allocation2 + $0x8] sm:$0xf] %v178
    %187 = vst [vmem:[#allocation2 + $0xc] sm:$0xf] %v179
    // Predicated region
    $region14: #{tpu_custom_call.1} parent=1 // pred_check
      _
    $region15: #{tpu_custom_call.1} parent=1 // pred_check_branch
      %189 = sbr.rel (0) target = $region17
    $region16: #{tpu_custom_call.1} parent=1 // pred_region
      %s191 = ssub.s32 256, 256
      %192 = vsyncadd [#allocation3], %s191
      %s193 = sshll.u32 [#allocation2], 4
      %s194 = int_to_ptr.vmem [resolvable:$true] %s193
      %199 = dma.vmem_to_hbm [thread:$0]  %s194, 256, %s3, [#allocation3], 64, 64, 4
    $region17: #{tpu_custom_call.1} parent=1 // pred_fallthru
      _
    // Predicated region
    $region18: #{tpu_custom_call.1} parent=1 // pred_check
      _
    $region19: #{tpu_custom_call.1} parent=1 // pred_check_branch
      %201 = sbr.rel (0) target = $region21
    $region20: #{tpu_custom_call.1} parent=1 // pred_region
      %202 = dma.done [#allocation3], 256
    $region21: #{tpu_custom_call.1} parent=1 // pred_fallthru
      _
    %203 = vsyncpa [#allocation3], 1

</llo_original>
